<compile_context>
chip_gen: v5e
topology: v5e:2x2
jax: 0.10.0
libtpu: 0.0.40
codegen_flags: <defaults>
</compile_context>

<pallas_src>
import jax
import jax.numpy as jnp
from jax.experimental import pallas as pl
from jax.experimental.pallas import tpu as pltpu


def _round_up(n, m):
    return ((n + m - 1) // m) * m


# ----------------------------------------------------------------------------
# Pallas kernel: one batch tile of the whole PCSNetWithAE forward
# ----------------------------------------------------------------------------
def pcsnet_kernel(
    x_ref,
    # encoder
    w_e1_ref, b_e1_ref, w_e2_ref, b_e2_ref, w_e3_ref, b_e3_ref,
    # decoder
    w_d1_ref, b_d1_ref, w_d2_ref, b_d2_ref, w_d3_ref, b_d3_ref,
    # folded PFA·CAS (lane-dense, score in lane 0)
    w_sc_ref, b_sc_ref,
    # outputs
    decoded_ref, score_ref,
):
    x = x_ref[...].astype(jnp.float32)

    def linear(inp, w_ref, b_ref):
        return (
            jnp.dot(inp, w_ref[...], preferred_element_type=jnp.float32)
            + b_ref[...]
        )

    # --- Autoencoder encoder ---
    h = jnp.maximum(linear(x, w_e1_ref, b_e1_ref), 0.0)          # [TB, Hp]
    h = jnp.maximum(linear(h, w_e2_ref, b_e2_ref), 0.0)          # [TB, H2p]
    encoded = linear(h, w_e3_ref, b_e3_ref)                      # [TB, H4p]

    # --- Autoencoder decoder ---
    d = jnp.maximum(linear(encoded, w_d1_ref, b_d1_ref), 0.0)    # [TB, H2p]
    d = jnp.maximum(linear(d, w_d2_ref, b_d2_ref), 0.0)          # [TB, Hp]
    logits = linear(d, w_d3_ref, b_d3_ref)                       # [TB, Fp]
    # sigmoid(x) == 0.5 * tanh(x/2) + 0.5  ->  tanh on the EUP, no VPU divide.
    decoded_ref[...] = (0.5 * jnp.tanh(0.5 * logits) + 0.5).astype(decoded_ref.dtype)

    # --- PFA + CAS (pre-folded into one lane-dense matmul) ---
    score_ref[...] = linear(encoded, w_sc_ref, b_sc_ref).astype(score_ref.dtype)


# ----------------------------------------------------------------------------
# Wrapper: padding, PFA·CAS folding, batch grid, weight-resident BlockSpecs
# ----------------------------------------------------------------------------
def pcsnet_forward(x, params, *, tb=256):
    """x: [B, input_dim] float32. params: dict of [in,out] weights / [1,out] biases."""
    B, input_dim = x.shape
    h = params["w_e1"].shape[1]
    h2 = params["w_e2"].shape[1]
    h4 = params["w_e3"].shape[1]

    # Lane-aligned (padded) dims. Zero padding is numerically inert through
    # ReLU / matmul; padded sigmoid lanes and padded rows are sliced off below.
    Fp = _round_up(input_dim, 128)
    Hp = _round_up(h, 128)
    H2p = _round_up(h2, 128)
    H4p = _round_up(h4, 128)
    SCp = 128  # lane-dense score output; real score sits in lane 0

    f32 = jnp.float32

    def pad_w(w, rin, rout):
        w = w.astype(f32)
        return jnp.pad(w, ((0, rin - w.shape[0]), (0, rout - w.shape[1])))

    def pad_b(b, rout):
        b = b.astype(f32)
        return jnp.pad(b, ((0, 0), (0, rout - b.shape[1])))

    # Fold PFA (h4 -> h4) and CAS (h4 -> 1) into a single affine map.
    w_sc = params["w_pfa"].astype(f32) @ params["w_cas"].astype(f32)            # [h4, 1]
    b_sc = params["b_pfa"].astype(f32) @ params["w_cas"].astype(f32) + params["b_cas"].astype(f32)

    ordered = [
        pad_w(params["w_e1"], Fp, Hp),  pad_b(params["b_e1"], Hp),
        pad_w(params["w_e2"], Hp, H2p), pad_b(params["b_e2"], H2p),
        pad_w(params["w_e3"], H2p, H4p), pad_b(params["b_e3"], H4p),
        pad_w(params["w_d1"], H4p, H2p), pad_b(params["b_d1"], H2p),
        pad_w(params["w_d2"], H2p, Hp), pad_b(params["b_d2"], Hp),
        pad_w(params["w_d3"], Hp, Fp),  pad_b(params["b_d3"], Fp),
        pad_w(w_sc, H4p, SCp),          pad_b(b_sc, SCp),
    ]

    # Batch tiling: TB rows per grid step (multiple of 8 for f32 sublanes).
    # TODO(synk): for very wide real configs on v7x (64 MiB VMEM), re-derive TB.
    if B >= tb:
        TB = tb
    else:
        TB = _round_up(B, 8)
    B_pad = _round_up(B, TB)
    x_pad = jnp.pad(x.astype(f32), ((0, B_pad - B), (0, Fp - input_dim)))

    grid = (B_pad // TB,)
    tile_map = lambda i: (i, 0)       # batch-tiled arrays
    resident_map = lambda i: (0, 0)   # weights/biases: same block every step

    x_spec = pl.BlockSpec((TB, Fp), tile_map)
    param_specs = [pl.BlockSpec(p.shape, resident_map) for p in ordered]
    out_specs = (
        pl.BlockSpec((TB, Fp), tile_map),
        pl.BlockSpec((TB, SCp), tile_map),
    )

    # Advisory cost hint for XLA scheduling.
    flops = 2 * B_pad * (
        Fp * Hp + Hp * H2p + H2p * H4p + H4p * H2p + H2p * Hp + Hp * Fp + H4p * SCp
    )
    bytes_accessed = 4 * (
        B_pad * Fp            # x in
        + B_pad * Fp          # decoded out
        + B_pad * SCp         # score out
        + sum(int(p.size) for p in ordered)
    )
    cost = pl.CostEstimate(
        flops=flops, transcendentals=B_pad * Fp, bytes_accessed=bytes_accessed
    )

    decoded_pad, score_pad = pl.pallas_call(
        pcsnet_kernel,
        out_shape=(
            jax.ShapeDtypeStruct((B_pad, Fp), f32),   # decoded (padded)
            jax.ShapeDtypeStruct((B_pad, SCp), f32),  # anomaly score (lane 0)
        ),
        grid=grid,
        in_specs=[x_spec] + param_specs,
        out_specs=out_specs,
        compiler_params=pltpu.CompilerParams(dimension_semantics=("parallel",)),
        cost_estimate=cost,
    )(x_pad, *ordered)

    return decoded_pad[:B, :input_dim], score_pad[:B, :1]


# ----------------------------------------------------------------------------
# Deterministic parameter init (mimics nn.Linear's U(-1/sqrt(fan_in), +...))
# ----------------------------------------------------------------------------
def init_linear(key, fan_in, fan_out):
    kw, kb = jax.random.split(key)
    bound = 1.0 / jnp.sqrt(jnp.float32(fan_in))
    w = jax.random.uniform(kw, (fan_in, fan_out), jnp.float32, -bound, bound)
    b = jax.random.uniform(kb, (1, fan_out), jnp.float32, -bound, bound)
    return w, b


def init_params(key, input_dim, hidden_dim):
    h, h2, h4 = hidden_dim, hidden_dim // 2, hidden_dim // 4
    keys = jax.random.split(key, 8)
    p = {}
    p["w_e1"], p["b_e1"] = init_linear(keys[0], input_dim, h)
    p["w_e2"], p["b_e2"] = init_linear(keys[1], h, h2)
    p["w_e3"], p["b_e3"] = init_linear(keys[2], h2, h4)
    p["w_d1"], p["b_d1"] = init_linear(keys[3], h4, h2)
    p["w_d2"], p["b_d2"] = init_linear(keys[4], h2, h)
    p["w_d3"], p["b_d3"] = init_linear(keys[5], h, input_dim)
    p["w_pfa"], p["b_pfa"] = init_linear(keys[6], h4, h4)
    p["w_cas"], p["b_cas"] = init_linear(keys[7], h4, 1)
    return p


# Pure-JAX reference (matches the PyTorch module, no folding/padding).
def pcsnet_ref(x, p):
    def lin(v, w, b):
        return v @ w + b

    hh = jax.nn.relu(lin(x, p["w_e1"], p["b_e1"]))
    hh = jax.nn.relu(lin(hh, p["w_e2"], p["b_e2"]))
    enc = lin(hh, p["w_e3"], p["b_e3"])
    d = jax.nn.relu(lin(enc, p["w_d1"], p["b_d1"]))
    d = jax.nn.relu(lin(d, p["w_d2"], p["b_d2"]))
    dec = jax.nn.sigmoid(lin(d, p["w_d3"], p["b_d3"]))
    adapted = lin(enc, p["w_pfa"], p["b_pfa"])
    score = lin(adapted, p["w_cas"], p["b_cas"])
    return dec, score


if __name__ == "__main__":
    batch = 8
    input_dim = 16     # small synthetic analog of X_train.shape[1]
    hidden_dim = 32    # small analog of the original 128

    key = jax.random.PRNGKey(0)
    k_x, k_p = jax.random.split(key)
    x = jax.random.normal(k_x, (batch, input_dim), jnp.float32)
    params = init_params(k_p, input_dim, hidden_dim)

    decoded, score = pcsnet_forward(x, params)
    jax.block_until_ready((decoded, score))

    ref_dec, ref_score = pcsnet_ref(x, params)
    assert decoded.shape == (batch, input_dim)
    assert score.shape == (batch, 1)
    assert jnp.allclose(decoded, ref_dec, atol=1e-4, rtol=1e-4)
    assert jnp.allclose(score, ref_score, atol=1e-4, rtol=1e-4)

    print("KERNEL_OK")
</pallas_src>

<mosaic_0001>
module attributes {stable_mosaic.version = 11 : i64} {
  func.func @pcsnet_kernel(%arg0: i32, %arg1: memref<8x128xf32, #tpu.memory_space<vmem>>, %arg2: memref<128x128xf32, #tpu.memory_space<vmem>>, %arg3: memref<1x128xf32, #tpu.memory_space<vmem>>, %arg4: memref<128x128xf32, #tpu.memory_space<vmem>>, %arg5: memref<1x128xf32, #tpu.memory_space<vmem>>, %arg6: memref<128x128xf32, #tpu.memory_space<vmem>>, %arg7: memref<1x128xf32, #tpu.memory_space<vmem>>, %arg8: memref<128x128xf32, #tpu.memory_space<vmem>>, %arg9: memref<1x128xf32, #tpu.memory_space<vmem>>, %arg10: memref<128x128xf32, #tpu.memory_space<vmem>>, %arg11: memref<1x128xf32, #tpu.memory_space<vmem>>, %arg12: memref<128x128xf32, #tpu.memory_space<vmem>>, %arg13: memref<1x128xf32, #tpu.memory_space<vmem>>, %arg14: memref<128x128xf32, #tpu.memory_space<vmem>>, %arg15: memref<1x128xf32, #tpu.memory_space<vmem>>, %arg16: memref<8x128xf32, #tpu.memory_space<vmem>>, %arg17: memref<8x128xf32, #tpu.memory_space<vmem>>) attributes {dimension_semantics = [#tpu.dimension_semantics<parallel>], iteration_bounds = array<i64: 1>, scalar_prefetch = 0 : i64, scratch_operands = 0 : i64, tpu.core_type = #tpu.core_type<tc>, window_params = [{transform_indices = @transform_0, window_bounds = array<i64: 8, 128>}, {pipeline_mode = #tpu.pipeline_mode<synchronous>, transform_indices = @transform_1, window_bounds = array<i64: 128, 128>}, {pipeline_mode = #tpu.pipeline_mode<synchronous>, transform_indices = @transform_2, window_bounds = array<i64: 1, 128>}, {pipeline_mode = #tpu.pipeline_mode<synchronous>, transform_indices = @transform_3, window_bounds = array<i64: 128, 128>}, {pipeline_mode = #tpu.pipeline_mode<synchronous>, transform_indices = @transform_4, window_bounds = array<i64: 1, 128>}, {pipeline_mode = #tpu.pipeline_mode<synchronous>, transform_indices = @transform_5, window_bounds = array<i64: 128, 128>}, {pipeline_mode = #tpu.pipeline_mode<synchronous>, transform_indices = @transform_6, window_bounds = array<i64: 1, 128>}, {pipeline_mode = #tpu.pipeline_mode<synchronous>, transform_indices = @transform_7, window_bounds = array<i64: 128, 128>}, {pipeline_mode = #tpu.pipeline_mode<synchronous>, transform_indices = @transform_8, window_bounds = array<i64: 1, 128>}, {pipeline_mode = #tpu.pipeline_mode<synchronous>, transform_indices = @transform_9, window_bounds = array<i64: 128, 128>}, {pipeline_mode = #tpu.pipeline_mode<synchronous>, transform_indices = @transform_10, window_bounds = array<i64: 1, 128>}, {pipeline_mode = #tpu.pipeline_mode<synchronous>, transform_indices = @transform_11, window_bounds = array<i64: 128, 128>}, {pipeline_mode = #tpu.pipeline_mode<synchronous>, transform_indices = @transform_12, window_bounds = array<i64: 1, 128>}, {pipeline_mode = #tpu.pipeline_mode<synchronous>, transform_indices = @transform_13, window_bounds = array<i64: 128, 128>}, {pipeline_mode = #tpu.pipeline_mode<synchronous>, transform_indices = @transform_14, window_bounds = array<i64: 1, 128>}, {transform_indices = @transform_15, window_bounds = array<i64: 8, 128>}, {transform_indices = @transform_16, window_bounds = array<i64: 8, 128>}]} {
    %c0 = arith.constant 0 : index
    %c0_0 = arith.constant 0 : index
    %0 = vector.load %arg1[%c0, %c0_0] : memref<8x128xf32, #tpu.memory_space<vmem>>, vector<8x128xf32>
    %c0_1 = arith.constant 0 : index
    %c0_2 = arith.constant 0 : index
    %1 = vector.load %arg2[%c0_1, %c0_2] : memref<128x128xf32, #tpu.memory_space<vmem>>, vector<128x128xf32>
    %cst = arith.constant dense<0.000000e+00> : vector<8x128xf32>
    %2 = tpu.matmul %0, %1, %cst {dimension_numbers = #tpu.dot_dimension_numbers<[1], [0], [0], [1], [0, 0, 1, 1], [], []>} : vector<8x128xf32>, vector<128x128xf32>, vector<8x128xf32> -> vector<8x128xf32>
    %c0_3 = arith.constant 0 : index
    %c0_4 = arith.constant 0 : index
    %3 = vector.load %arg3[%c0_3, %c0_4] : memref<1x128xf32, #tpu.memory_space<vmem>>, vector<1x128xf32>
    %4 = vector.broadcast %3 : vector<1x128xf32> to vector<8x128xf32>
    %5 = arith.addf %2, %4 : vector<8x128xf32>
    %cst_5 = arith.constant 0.000000e+00 : f32
    %6 = vector.broadcast %cst_5 : f32 to vector<8x128xf32>
    %7 = arith.maximumf %5, %6 : vector<8x128xf32>
    %c0_6 = arith.constant 0 : index
    %c0_7 = arith.constant 0 : index
    %8 = vector.load %arg4[%c0_6, %c0_7] : memref<128x128xf32, #tpu.memory_space<vmem>>, vector<128x128xf32>
    %cst_8 = arith.constant dense<0.000000e+00> : vector<8x128xf32>
    %9 = tpu.matmul %7, %8, %cst_8 {dimension_numbers = #tpu.dot_dimension_numbers<[1], [0], [0], [1], [0, 0, 1, 1], [], []>} : vector<8x128xf32>, vector<128x128xf32>, vector<8x128xf32> -> vector<8x128xf32>
    %c0_9 = arith.constant 0 : index
    %c0_10 = arith.constant 0 : index
    %10 = vector.load %arg5[%c0_9, %c0_10] : memref<1x128xf32, #tpu.memory_space<vmem>>, vector<1x128xf32>
    %11 = vector.broadcast %10 : vector<1x128xf32> to vector<8x128xf32>
    %12 = arith.addf %9, %11 : vector<8x128xf32>
    %cst_11 = arith.constant 0.000000e+00 : f32
    %13 = vector.broadcast %cst_11 : f32 to vector<8x128xf32>
    %14 = arith.maximumf %12, %13 : vector<8x128xf32>
    %c0_12 = arith.constant 0 : index
    %c0_13 = arith.constant 0 : index
    %15 = vector.load %arg6[%c0_12, %c0_13] : memref<128x128xf32, #tpu.memory_space<vmem>>, vector<128x128xf32>
    %cst_14 = arith.constant dense<0.000000e+00> : vector<8x128xf32>
    %16 = tpu.matmul %14, %15, %cst_14 {dimension_numbers = #tpu.dot_dimension_numbers<[1], [0], [0], [1], [0, 0, 1, 1], [], []>} : vector<8x128xf32>, vector<128x128xf32>, vector<8x128xf32> -> vector<8x128xf32>
    %c0_15 = arith.constant 0 : index
    %c0_16 = arith.constant 0 : index
    %17 = vector.load %arg7[%c0_15, %c0_16] : memref<1x128xf32, #tpu.memory_space<vmem>>, vector<1x128xf32>
    %18 = vector.broadcast %17 : vector<1x128xf32> to vector<8x128xf32>
    %19 = arith.addf %16, %18 : vector<8x128xf32>
    %c0_17 = arith.constant 0 : index
    %c0_18 = arith.constant 0 : index
    %20 = vector.load %arg8[%c0_17, %c0_18] : memref<128x128xf32, #tpu.memory_space<vmem>>, vector<128x128xf32>
    %cst_19 = arith.constant dense<0.000000e+00> : vector<8x128xf32>
    %21 = tpu.matmul %19, %20, %cst_19 {dimension_numbers = #tpu.dot_dimension_numbers<[1], [0], [0], [1], [0, 0, 1, 1], [], []>} : vector<8x128xf32>, vector<128x128xf32>, vector<8x128xf32> -> vector<8x128xf32>
    %c0_20 = arith.constant 0 : index
    %c0_21 = arith.constant 0 : index
    %22 = vector.load %arg9[%c0_20, %c0_21] : memref<1x128xf32, #tpu.memory_space<vmem>>, vector<1x128xf32>
    %23 = vector.broadcast %22 : vector<1x128xf32> to vector<8x128xf32>
    %24 = arith.addf %21, %23 : vector<8x128xf32>
    %cst_22 = arith.constant 0.000000e+00 : f32
    %25 = vector.broadcast %cst_22 : f32 to vector<8x128xf32>
    %26 = arith.maximumf %24, %25 : vector<8x128xf32>
    %c0_23 = arith.constant 0 : index
    %c0_24 = arith.constant 0 : index
    %27 = vector.load %arg10[%c0_23, %c0_24] : memref<128x128xf32, #tpu.memory_space<vmem>>, vector<128x128xf32>
    %cst_25 = arith.constant dense<0.000000e+00> : vector<8x128xf32>
    %28 = tpu.matmul %26, %27, %cst_25 {dimension_numbers = #tpu.dot_dimension_numbers<[1], [0], [0], [1], [0, 0, 1, 1], [], []>} : vector<8x128xf32>, vector<128x128xf32>, vector<8x128xf32> -> vector<8x128xf32>
    %c0_26 = arith.constant 0 : index
    %c0_27 = arith.constant 0 : index
    %29 = vector.load %arg11[%c0_26, %c0_27] : memref<1x128xf32, #tpu.memory_space<vmem>>, vector<1x128xf32>
    %30 = vector.broadcast %29 : vector<1x128xf32> to vector<8x128xf32>
    %31 = arith.addf %28, %30 : vector<8x128xf32>
    %cst_28 = arith.constant 0.000000e+00 : f32
    %32 = vector.broadcast %cst_28 : f32 to vector<8x128xf32>
    %33 = arith.maximumf %31, %32 : vector<8x128xf32>
    %c0_29 = arith.constant 0 : index
    %c0_30 = arith.constant 0 : index
    %34 = vector.load %arg12[%c0_29, %c0_30] : memref<128x128xf32, #tpu.memory_space<vmem>>, vector<128x128xf32>
    %cst_31 = arith.constant dense<0.000000e+00> : vector<8x128xf32>
    %35 = tpu.matmul %33, %34, %cst_31 {dimension_numbers = #tpu.dot_dimension_numbers<[1], [0], [0], [1], [0, 0, 1, 1], [], []>} : vector<8x128xf32>, vector<128x128xf32>, vector<8x128xf32> -> vector<8x128xf32>
    %c0_32 = arith.constant 0 : index
    %c0_33 = arith.constant 0 : index
    %36 = vector.load %arg13[%c0_32, %c0_33] : memref<1x128xf32, #tpu.memory_space<vmem>>, vector<1x128xf32>
    %37 = vector.broadcast %36 : vector<1x128xf32> to vector<8x128xf32>
    %38 = arith.addf %35, %37 : vector<8x128xf32>
    %cst_34 = arith.constant 5.000000e-01 : f32
    %39 = vector.broadcast %cst_34 : f32 to vector<8x128xf32>
    %40 = arith.mulf %39, %38 : vector<8x128xf32>
    %41 = math.tanh %40 : vector<8x128xf32>
    %cst_35 = arith.constant 5.000000e-01 : f32
    %42 = vector.broadcast %cst_35 : f32 to vector<8x128xf32>
    %43 = arith.mulf %42, %41 : vector<8x128xf32>
    %cst_36 = arith.constant 5.000000e-01 : f32
    %44 = vector.broadcast %cst_36 : f32 to vector<8x128xf32>
    %45 = arith.addf %43, %44 : vector<8x128xf32>
    %c0_37 = arith.constant 0 : index
    %c0_38 = arith.constant 0 : index
    %46 = vector.load %arg16[%c0_37, %c0_38] : memref<8x128xf32, #tpu.memory_space<vmem>>, vector<8x128xf32>
    tpu.vector_store %arg16[%c0_37, %c0_38], %45 {strides = array<i32>} : memref<8x128xf32, #tpu.memory_space<vmem>>, vector<8x128xf32>,
    %c0_39 = arith.constant 0 : index
    %c0_40 = arith.constant 0 : index
    %47 = vector.load %arg14[%c0_39, %c0_40] : memref<128x128xf32, #tpu.memory_space<vmem>>, vector<128x128xf32>
    %cst_41 = arith.constant dense<0.000000e+00> : vector<8x128xf32>
    %48 = tpu.matmul %19, %47, %cst_41 {dimension_numbers = #tpu.dot_dimension_numbers<[1], [0], [0], [1], [0, 0, 1, 1], [], []>} : vector<8x128xf32>, vector<128x128xf32>, vector<8x128xf32> -> vector<8x128xf32>
    %c0_42 = arith.constant 0 : index
    %c0_43 = arith.constant 0 : index
    %49 = vector.load %arg15[%c0_42, %c0_43] : memref<1x128xf32, #tpu.memory_space<vmem>>, vector<1x128xf32>
    %50 = vector.broadcast %49 : vector<1x128xf32> to vector<8x128xf32>
    %51 = arith.addf %48, %50 : vector<8x128xf32>
    %c0_44 = arith.constant 0 : index
    %c0_45 = arith.constant 0 : index
    %52 = vector.load %arg17[%c0_44, %c0_45] : memref<8x128xf32, #tpu.memory_space<vmem>>, vector<8x128xf32>
    tpu.vector_store %arg17[%c0_44, %c0_45], %51 {strides = array<i32>} : memref<8x128xf32, #tpu.memory_space<vmem>>, vector<8x128xf32>,
    return
  }
  func.func @transform_0(%arg0: i32) -> (i32, i32) {
    %c0_i32 = arith.constant 0 : i32
    %c0_i32_0 = arith.constant 0 : i32
    return %arg0, %c0_i32 : i32, i32
  }
  func.func @transform_1(%arg0: i32) -> (i32, i32) {
    %c0_i32 = arith.constant 0 : i32
    %c0_i32_0 = arith.constant 0 : i32
    %c0_i32_1 = arith.constant 0 : i32
    return %c0_i32, %c0_i32_0 : i32, i32
  }
  func.func @transform_2(%arg0: i32) -> (i32, i32) {
    %c0_i32 = arith.constant 0 : i32
    %c0_i32_0 = arith.constant 0 : i32
    %c0_i32_1 = arith.constant 0 : i32
    return %c0_i32, %c0_i32_0 : i32, i32
  }
  func.func @transform_3(%arg0: i32) -> (i32, i32) {
    %c0_i32 = arith.constant 0 : i32
    %c0_i32_0 = arith.constant 0 : i32
    %c0_i32_1 = arith.constant 0 : i32
    return %c0_i32, %c0_i32_0 : i32, i32
  }
  func.func @transform_4(%arg0: i32) -> (i32, i32) {
    %c0_i32 = arith.constant 0 : i32
    %c0_i32_0 = arith.constant 0 : i32
    %c0_i32_1 = arith.constant 0 : i32
    return %c0_i32, %c0_i32_0 : i32, i32
  }
  func.func @transform_5(%arg0: i32) -> (i32, i32) {
    %c0_i32 = arith.constant 0 : i32
    %c0_i32_0 = arith.constant 0 : i32
    %c0_i32_1 = arith.constant 0 : i32
    return %c0_i32, %c0_i32_0 : i32, i32
  }
  func.func @transform_6(%arg0: i32) -> (i32, i32) {
    %c0_i32 = arith.constant 0 : i32
    %c0_i32_0 = arith.constant 0 : i32
    %c0_i32_1 = arith.constant 0 : i32
    return %c0_i32, %c0_i32_0 : i32, i32
  }
  func.func @transform_7(%arg0: i32) -> (i32, i32) {
    %c0_i32 = arith.constant 0 : i32
    %c0_i32_0 = arith.constant 0 : i32
    %c0_i32_1 = arith.constant 0 : i32
    return %c0_i32, %c0_i32_0 : i32, i32
  }
  func.func @transform_8(%arg0: i32) -> (i32, i32) {
    %c0_i32 = arith.constant 0 : i32
    %c0_i32_0 = arith.constant 0 : i32
    %c0_i32_1 = arith.constant 0 : i32
    return %c0_i32, %c0_i32_0 : i32, i32
  }
  func.func @transform_9(%arg0: i32) -> (i32, i32) {
    %c0_i32 = arith.constant 0 : i32
    %c0_i32_0 = arith.constant 0 : i32
    %c0_i32_1 = arith.constant 0 : i32
    return %c0_i32, %c0_i32_0 : i32, i32
  }
  func.func @transform_10(%arg0: i32) -> (i32, i32) {
    %c0_i32 = arith.constant 0 : i32
    %c0_i32_0 = arith.constant 0 : i32
    %c0_i32_1 = arith.constant 0 : i32
    return %c0_i32, %c0_i32_0 : i32, i32
  }
  func.func @transform_11(%arg0: i32) -> (i32, i32) {
    %c0_i32 = arith.constant 0 : i32
    %c0_i32_0 = arith.constant 0 : i32
    %c0_i32_1 = arith.constant 0 : i32
    return %c0_i32, %c0_i32_0 : i32, i32
  }
  func.func @transform_12(%arg0: i32) -> (i32, i32) {
    %c0_i32 = arith.constant 0 : i32
    %c0_i32_0 = arith.constant 0 : i32
    %c0_i32_1 = arith.constant 0 : i32
    return %c0_i32, %c0_i32_0 : i32, i32
  }
  func.func @transform_13(%arg0: i32) -> (i32, i32) {
    %c0_i32 = arith.constant 0 : i32
    %c0_i32_0 = arith.constant 0 : i32
    %c0_i32_1 = arith.constant 0 : i32
    return %c0_i32, %c0_i32_0 : i32, i32
  }
  func.func @transform_14(%arg0: i32) -> (i32, i32) {
    %c0_i32 = arith.constant 0 : i32
    %c0_i32_0 = arith.constant 0 : i32
    %c0_i32_1 = arith.constant 0 : i32
    return %c0_i32, %c0_i32_0 : i32, i32
  }
  func.func @transform_15(%arg0: i32) -> (i32, i32) {
    %c0_i32 = arith.constant 0 : i32
    %c0_i32_0 = arith.constant 0 : i32
    return %arg0, %c0_i32 : i32, i32
  }
  func.func @transform_16(%arg0: i32) -> (i32, i32) {
    %c0_i32 = arith.constant 0 : i32
    %c0_i32_0 = arith.constant 0 : i32
    return %arg0, %c0_i32 : i32, i32
  }
}

</mosaic_0001>

<llo_original>
// kernel: tpu_custom_call.1
$region0: #{tpu_custom_call.1}
  #allocation0 [shape = 'u32[]', space=smem, size = 0x4, offset = 0x4, fixed_abs, tag = 'smem constant byte address 0x4 - core index']
  #allocation1 [shape = 'u32[72,128]{1,0:T(1,128)}', space=vmem, size = 0x9000, scoped, tag = 'internal scratch']
  %s0 = inlined_call_operand.hbm [shape: f32[8,128], index: 0, kind: input, shape index: {}]
  %s1 = inlined_call_operand.hbm [shape: f32[128,128], index: 1, kind: input, shape index: {}]
  %s2 = inlined_call_operand.vmem [shape: f32[1,128], index: 2, kind: input, shape index: {}]
  %s3 = inlined_call_operand.hbm [shape: f32[128,128], index: 3, kind: input, shape index: {}]
  %s4 = inlined_call_operand.vmem [shape: f32[1,128], index: 4, kind: input, shape index: {}]
  %s5 = inlined_call_operand.hbm [shape: f32[128,128], index: 5, kind: input, shape index: {}]
  %s6 = inlined_call_operand.vmem [shape: f32[1,128], index: 6, kind: input, shape index: {}]
  %s7 = inlined_call_operand.hbm [shape: f32[128,128], index: 7, kind: input, shape index: {}]
  %s8 = inlined_call_operand.vmem [shape: f32[1,128], index: 8, kind: input, shape index: {}]
  %s9 = inlined_call_operand.hbm [shape: f32[128,128], index: 9, kind: input, shape index: {}]
  %s10 = inlined_call_operand.vmem [shape: f32[1,128], index: 10, kind: input, shape index: {}]
  %s11 = inlined_call_operand.hbm [shape: f32[128,128], index: 11, kind: input, shape index: {}]
  %s12 = inlined_call_operand.vmem [shape: f32[1,128], index: 12, kind: input, shape index: {}]
  %s13 = inlined_call_operand.hbm [shape: f32[128,128], index: 13, kind: input, shape index: {}]
  %s14 = inlined_call_operand.vmem [shape: f32[1,128], index: 14, kind: input, shape index: {}]
  %s15 = inlined_call_operand.hbm [shape: f32[8,128], index: 15, kind: output, shape index: {0}]
  %s16 = inlined_call_operand.hbm [shape: f32[8,128], index: 16, kind: output, shape index: {1}]
  %17 = xla_tuple %s15, %s16
  %s18 = sld [smem:[#allocation0]]
  $region110: #{tpu_custom_call.1} parent=0
    _
  %s20 = ssub.s32 1, %s18
  %s21 = scalar_select 0, %s20, %s18
  $region1: #{tpu_custom_call.1} parent=0
    #allocation2 [shape = 'u8[4096]{0}', space=vmem, size = 0x1000, scoped, tag = 'input window, operand 0, single buffered']
    #allocation3 [shape = 's32[1]{0}', space=sflag, size = 0x4, scoped, tag = 'scoped memory for tpu_custom_call.1']
    #allocation4 [shape = 's32[1]{0}', space=sflag, size = 0x4, scoped, tag = 'scoped memory for tpu_custom_call.1']
    #allocation5 [shape = 'u8[65536]{0}', space=vmem, size = 0x10000, scoped, tag = 'input window, operand 1, single buffered']
    #allocation6 [shape = 's32[1]{0}', space=sflag, size = 0x4, scoped, tag = 'scoped memory for tpu_custom_call.1']
    #allocation7 [shape = 'u8[65536]{0}', space=vmem, size = 0x10000, scoped, tag = 'input window, operand 3, single buffered']
    #allocation8 [shape = 'u8[65536]{0}', space=vmem, size = 0x10000, scoped, tag = 'input window, operand 5, single buffered']
    #allocation9 [shape = 's32[1]{0}', space=sflag, size = 0x4, scoped, tag = 'scoped memory for tpu_custom_call.1']
    #allocation10 [shape = 'u8[65536]{0}', space=vmem, size = 0x10000, scoped, tag = 'input window, operand 7, single buffered']
    #allocation11 [shape = 'u8[65536]{0}', space=vmem, size = 0x10000, scoped, tag = 'input window, operand 9, single buffered']
    #allocation12 [shape = 's32[1]{0}', space=sflag, size = 0x4, scoped, tag = 'scoped memory for tpu_custom_call.1']
    #allocation13 [shape = 'u8[65536]{0}', space=vmem, size = 0x10000, scoped, tag = 'input window, operand 11, single buffered']
    #allocation14 [shape = 'u8[65536]{0}', space=vmem, size = 0x10000, scoped, tag = 'input window, operand 13, single buffered']
    #allocation15 [shape = 's32[1]{0}', space=sflag, size = 0x4, scoped, tag = 'scoped memory for tpu_custom_call.1']
    #allocation16 [shape = 'u8[4096]{0}', space=vmem, size = 0x1000, scoped, tag = 'output window, operand 0, single buffered']
    #allocation17 [shape = 'u8[4096]{0}', space=vmem, size = 0x1000, scoped, tag = 'output window, operand 1, single buffered']
    #allocation18 [shape = 's32[1]{0}', space=sflag, size = 0x4, scoped, tag = 'scoped memory for tpu_custom_call.1']
    %22 = vsyncpa [#allocation3], 0
    %23 = vsyncpa [#allocation6], 0
    %24 = vsyncpa [#allocation9], 0
    %25 = vsyncpa [#allocation12], 0
    %26 = vsyncpa [#allocation15], 0
    %27 = vsyncpa [#allocation4], 0
    %28 = vsyncpa [#allocation18], 0
    // Predicated region
    $region2: #{tpu_custom_call.1} parent=1 // pred_check
      _
    $region3: #{tpu_custom_call.1} parent=1 // pred_check_branch
      %30 = sbr.rel (0) target = $region5
    $region4: #{tpu_custom_call.1} parent=1 // pred_region
      %32 = vsyncadd [#allocation3], 0
      %s34 = sshll.u32 %s0, 4
      %s35 = int_to_ptr.hbm [resolvable:$true] %s34
      %s36 = sshll.u32 [#allocation2], 4
      %s37 = int_to_ptr.vmem [resolvable:$true] %s36
      %39 = dma.hbm_to_vmem [thread:$0]  %s35, 128, %s37, [#allocation3]
    $region5: #{tpu_custom_call.1} parent=1 // pred_fallthru
      _
    // Predicated region
    $region6: #{tpu_custom_call.1} parent=1 // pred_check
      _
    $region7: #{tpu_custom_call.1} parent=1 // pred_check_branch
      %41 = sbr.rel (0) target = $region9
    $region8: #{tpu_custom_call.1} parent=1 // pred_region
      %43 = vsyncadd [#allocation6], 0
      %s44 = sshll.u32 %s1, 4
      %s45 = int_to_ptr.hbm [resolvable:$true] %s44
      %s46 = sshll.u32 [#allocation5], 4
      %s47 = int_to_ptr.vmem [resolvable:$true] %s46
      %52 = dma.hbm_to_vmem [thread:$0]  %s45, 2048, %s47, [#allocation6], 128, 128, 8
    $region9: #{tpu_custom_call.1} parent=1 // pred_fallthru
      _
    // Predicated region
    $region10: #{tpu_custom_call.1} parent=1 // pred_check
      _
    $region11: #{tpu_custom_call.1} parent=1 // pred_check_branch
      %54 = sbr.rel (0) target = $region13
    $region12: #{tpu_custom_call.1} parent=1 // pred_region
      _
    $region13: #{tpu_custom_call.1} parent=1 // pred_fallthru
      _
    // Predicated region
    $region14: #{tpu_custom_call.1} parent=1 // pred_check
      _
    $region15: #{tpu_custom_call.1} parent=1 // pred_check_branch
      %56 = sbr.rel (0) target = $region17
    $region16: #{tpu_custom_call.1} parent=1 // pred_region
      %58 = vsyncadd [#allocation6], 0
      %s59 = sshll.u32 %s3, 4
      %s60 = int_to_ptr.hbm [resolvable:$true] %s59
      %s61 = sshll.u32 [#allocation7], 4
      %s62 = int_to_ptr.vmem [resolvable:$true] %s61
      %67 = dma.hbm_to_vmem [thread:$0]  %s60, 2048, %s62, [#allocation6], 128, 128, 8
    $region17: #{tpu_custom_call.1} parent=1 // pred_fallthru
      _
    // Predicated region
    $region18: #{tpu_custom_call.1} parent=1 // pred_check
      _
    $region19: #{tpu_custom_call.1} parent=1 // pred_check_branch
      %69 = sbr.rel (0) target = $region21
    $region20: #{tpu_custom_call.1} parent=1 // pred_region
      _
    $region21: #{tpu_custom_call.1} parent=1 // pred_fallthru
      _
    // Predicated region
    $region22: #{tpu_custom_call.1} parent=1 // pred_check
      _
    $region23: #{tpu_custom_call.1} parent=1 // pred_check_branch
      %71 = sbr.rel (0) target = $region25
    $region24: #{tpu_custom_call.1} parent=1 // pred_region
      %73 = vsyncadd [#allocation9], 0
      %s74 = sshll.u32 %s5, 4
      %s75 = int_to_ptr.hbm [resolvable:$true] %s74
      %s76 = sshll.u32 [#allocation8], 4
      %s77 = int_to_ptr.vmem [resolvable:$true] %s76
      %82 = dma.hbm_to_vmem [thread:$0]  %s75, 2048, %s77, [#allocation9], 128, 128, 8
    $region25: #{tpu_custom_call.1} parent=1 // pred_fallthru
      _
    // Predicated region
    $region26: #{tpu_custom_call.1} parent=1 // pred_check
      _
    $region27: #{tpu_custom_call.1} parent=1 // pred_check_branch
      %84 = sbr.rel (0) target = $region29
    $region28: #{tpu_custom_call.1} parent=1 // pred_region
      _
    $region29: #{tpu_custom_call.1} parent=1 // pred_fallthru
      _
    // Predicated region
    $region30: #{tpu_custom_call.1} parent=1 // pred_check
      _
    $region31: #{tpu_custom_call.1} parent=1 // pred_check_branch
      %86 = sbr.rel (0) target = $region33
    $region32: #{tpu_custom_call.1} parent=1 // pred_region
      %88 = vsyncadd [#allocation9], 0
      %s89 = sshll.u32 %s7, 4
      %s90 = int_to_ptr.hbm [resolvable:$true] %s89
      %s91 = sshll.u32 [#allocation10], 4
      %s92 = int_to_ptr.vmem [resolvable:$true] %s91
      %97 = dma.hbm_to_vmem [thread:$0]  %s90, 2048, %s92, [#allocation9], 128, 128, 8
    $region33: #{tpu_custom_call.1} parent=1 // pred_fallthru
      _
    // Predicated region
    $region34: #{tpu_custom_call.1} parent=1 // pred_check
      _
    $region35: #{tpu_custom_call.1} parent=1 // pred_check_branch
      %99 = sbr.rel (0) target = $region37
    $region36: #{tpu_custom_call.1} parent=1 // pred_region
      _
    $region37: #{tpu_custom_call.1} parent=1 // pred_fallthru
      _
    // Predicated region
    $region38: #{tpu_custom_call.1} parent=1 // pred_check
      _
    $region39: #{tpu_custom_call.1} parent=1 // pred_check_branch
      %101 = sbr.rel (0) target = $region41
    $region40: #{tpu_custom_call.1} parent=1 // pred_region
      %103 = vsyncadd [#allocation12], 0
      %s104 = sshll.u32 %s9, 4
      %s105 = int_to_ptr.hbm [resolvable:$true] %s104
      %s106 = sshll.u32 [#allocation11], 4
      %s107 = int_to_ptr.vmem [resolvable:$true] %s106
      %112 = dma.hbm_to_vmem [thread:$0]  %s105, 2048, %s107, [#allocation12], 128, 128, 8
    $region41: #{tpu_custom_call.1} parent=1 // pred_fallthru
      _
    // Predicated region
    $region42: #{tpu_custom_call.1} parent=1 // pred_check
      _
    $region43: #{tpu_custom_call.1} parent=1 // pred_check_branch
      %114 = sbr.rel (0) target = $region45
    $region44: #{tpu_custom_call.1} parent=1 // pred_region
      _
    $region45: #{tpu_custom_call.1} parent=1 // pred_fallthru
      _
    // Predicated region
    $region46: #{tpu_custom_call.1} parent=1 // pred_check
      _
    $region47: #{tpu_custom_call.1} parent=1 // pred_check_branch
      %116 = sbr.rel (0) target = $region49
    $region48: #{tpu_custom_call.1} parent=1 // pred_region
      %118 = vsyncadd [#allocation12], 0
      %s119 = sshll.u32 %s11, 4
      %s120 = int_to_ptr.hbm [resolvable:$true] %s119
      %s121 = sshll.u32 [#allocation13], 4
      %s122 = int_to_ptr.vmem [resolvable:$true] %s121
      %127 = dma.hbm_to_vmem [thread:$0]  %s120, 2048, %s122, [#allocation12], 128, 128, 8
    $region49: #{tpu_custom_call.1} parent=1 // pred_fallthru
      _
    // Predicated region
    $region50: #{tpu_custom_call.1} parent=1 // pred_check
      _
    $region51: #{tpu_custom_call.1} parent=1 // pred_check_branch
      %129 = sbr.rel (0) target = $region53
    $region52: #{tpu_custom_call.1} parent=1 // pred_region
      _
    $region53: #{tpu_custom_call.1} parent=1 // pred_fallthru
      _
    // Predicated region
    $region54: #{tpu_custom_call.1} parent=1 // pred_check
      _
    $region55: #{tpu_custom_call.1} parent=1 // pred_check_branch
      %131 = sbr.rel (0) target = $region57
    $region56: #{tpu_custom_call.1} parent=1 // pred_region
      %133 = vsyncadd [#allocation15], 0
      %s134 = sshll.u32 %s13, 4
      %s135 = int_to_ptr.hbm [resolvable:$true] %s134
      %s136 = sshll.u32 [#allocation14], 4
      %s137 = int_to_ptr.vmem [resolvable:$true] %s136
      %142 = dma.hbm_to_vmem [thread:$0]  %s135, 2048, %s137, [#allocation15], 128, 128, 8
    $region57: #{tpu_custom_call.1} parent=1 // pred_fallthru
      _
    // Predicated region
    $region58: #{tpu_custom_call.1} parent=1 // pred_check
      _
    $region59: #{tpu_custom_call.1} parent=1 // pred_check_branch
      %144 = sbr.rel (0) target = $region61
    $region60: #{tpu_custom_call.1} parent=1 // pred_region
      _
    $region61: #{tpu_custom_call.1} parent=1 // pred_fallthru
      _
    // Predicated region
    $region62: #{tpu_custom_call.1} parent=1 // pred_check
      _
    $region63: #{tpu_custom_call.1} parent=1 // pred_check_branch
      %146 = sbr.rel (0) target = $region65
    $region64: #{tpu_custom_call.1} parent=1 // pred_region
      %148 = dma.done [#allocation3], 128
    $region65: #{tpu_custom_call.1} parent=1 // pred_fallthru
      _
    // Predicated region
    $region66: #{tpu_custom_call.1} parent=1 // pred_check
      _
    $region67: #{tpu_custom_call.1} parent=1 // pred_check_branch
      %150 = sbr.rel (0) target = $region69
    $region68: #{tpu_custom_call.1} parent=1 // pred_region
      %152 = dma.done [#allocation6], 2048
    $region69: #{tpu_custom_call.1} parent=1 // pred_fallthru
      _
    // Predicated region
    $region70: #{tpu_custom_call.1} parent=1 // pred_check
      _
    $region71: #{tpu_custom_call.1} parent=1 // pred_check_branch
      %154 = sbr.rel (0) target = $region73
    $region72: #{tpu_custom_call.1} parent=1 // pred_region
      %156 = dma.done [#allocation6], 2048
    $region73: #{tpu_custom_call.1} parent=1 // pred_fallthru
      _
    // Predicated region
    $region74: #{tpu_custom_call.1} parent=1 // pred_check
      _
    $region75: #{tpu_custom_call.1} parent=1 // pred_check_branch
      %158 = sbr.rel (0) target = $region77
    $region76: #{tpu_custom_call.1} parent=1 // pred_region
      %160 = dma.done [#allocation9], 2048
    $region77: #{tpu_custom_call.1} parent=1 // pred_fallthru
      _
    // Predicated region
    $region78: #{tpu_custom_call.1} parent=1 // pred_check
      _
    $region79: #{tpu_custom_call.1} parent=1 // pred_check_branch
      %162 = sbr.rel (0) target = $region81
    $region80: #{tpu_custom_call.1} parent=1 // pred_region
      %164 = dma.done [#allocation9], 2048
    $region81: #{tpu_custom_call.1} parent=1 // pred_fallthru
      _
    // Predicated region
    $region82: #{tpu_custom_call.1} parent=1 // pred_check
      _
    $region83: #{tpu_custom_call.1} parent=1 // pred_check_branch
      %166 = sbr.rel (0) target = $region85
    $region84: #{tpu_custom_call.1} parent=1 // pred_region
      %168 = dma.done [#allocation12], 2048
    $region85: #{tpu_custom_call.1} parent=1 // pred_fallthru
      _
    // Predicated region
    $region86: #{tpu_custom_call.1} parent=1 // pred_check
      _
    $region87: #{tpu_custom_call.1} parent=1 // pred_check_branch
      %170 = sbr.rel (0) target = $region89
    $region88: #{tpu_custom_call.1} parent=1 // pred_region
      %172 = dma.done [#allocation12], 2048
    $region89: #{tpu_custom_call.1} parent=1 // pred_fallthru
      _
    // Predicated region
    $region90: #{tpu_custom_call.1} parent=1 // pred_check
      _
    $region91: #{tpu_custom_call.1} parent=1 // pred_check_branch
      %174 = sbr.rel (0) target = $region93
    $region92: #{tpu_custom_call.1} parent=1 // pred_region
      %176 = dma.done [#allocation15], 2048
    $region93: #{tpu_custom_call.1} parent=1 // pred_fallthru
      _
    %v177 = vld [vmem:[#allocation2] sm:$0xff]
    %v178 = vld [vmem:[#allocation5] sm:$0xff]
    %v179 = vld [vmem:[#allocation5 + $0x8] sm:$0xff]
    %v180 = vld [vmem:[#allocation5 + $0x10] sm:$0xff]
    %v181 = vld [vmem:[#allocation5 + $0x18] sm:$0xff]
    %v182 = vld [vmem:[#allocation5 + $0x20] sm:$0xff]
    %v183 = vld [vmem:[#allocation5 + $0x28] sm:$0xff]
    %v184 = vld [vmem:[#allocation5 + $0x30] sm:$0xff]
    %v185 = vld [vmem:[#allocation5 + $0x38] sm:$0xff]
    %v186 = vld [vmem:[#allocation5 + $0x40] sm:$0xff]
    %v187 = vld [vmem:[#allocation5 + $0x48] sm:$0xff]
    %v188 = vld [vmem:[#allocation5 + $0x50] sm:$0xff]
    %v189 = vld [vmem:[#allocation5 + $0x58] sm:$0xff]
    %v190 = vld [vmem:[#allocation5 + $0x60] sm:$0xff]
    %v191 = vld [vmem:[#allocation5 + $0x68] sm:$0xff]
    %v192 = vld [vmem:[#allocation5 + $0x70] sm:$0xff]
    %v193 = vld [vmem:[#allocation5 + $0x78] sm:$0xff]
    %v194 = vld [vmem:[%s2] sm:$0x1]
    %v196 = vperm.slane %v194, 0
    %198 = vmatpush.msra.mxu0 %v193
    %199 = vmatpush.msra.mxu0 %v192
    %200 = vmatpush.msra.mxu0 %v191
    %201 = vmatpush.msra.mxu0 %v190
    %202 = vmatpush.msra.mxu0 %v189
    %203 = vmatpush.msra.mxu0 %v188
    %204 = vmatpush.msra.mxu0 %v187
    %205 = vmatpush.msra.mxu0 %v186
    %206 = vmatpush.msra.mxu0 %v185
    %207 = vmatpush.msra.mxu0 %v184
    %208 = vmatpush.msra.mxu0 %v183
    %209 = vmatpush.msra.mxu0 %v182
    %210 = vmatpush.msra.mxu0 %v181
    %211 = vmatpush.msra.mxu0 %v180
    %212 = vmatpush.msra.mxu0 %v179
    %213 = vmatpush.msra.mxu0 %v178
    %214 = vmatmul.f32.gmra.mxu0 %v177
    %v215 = vpop.f32.mrf.mxu0
    %v216 = vadd.f32 %v196, %v215
    %217 = vdwg.mxu0
    %v218 = vmax.f32 %v216, 0.0
    %v219 = vld [vmem:[#allocation7] sm:$0xff]
    %v220 = vld [vmem:[#allocation7 + $0x8] sm:$0xff]
    %v221 = vld [vmem:[#allocation7 + $0x10] sm:$0xff]
    %v222 = vld [vmem:[#allocation7 + $0x18] sm:$0xff]
    %v223 = vld [vmem:[#allocation7 + $0x20] sm:$0xff]
    %v224 = vld [vmem:[#allocation7 + $0x28] sm:$0xff]
    %v225 = vld [vmem:[#allocation7 + $0x30] sm:$0xff]
    %v226 = vld [vmem:[#allocation7 + $0x38] sm:$0xff]
    %v227 = vld [vmem:[#allocation7 + $0x40] sm:$0xff]
    %v228 = vld [vmem:[#allocation7 + $0x48] sm:$0xff]
    %v229 = vld [vmem:[#allocation7 + $0x50] sm:$0xff]
    %v230 = vld [vmem:[#allocation7 + $0x58] sm:$0xff]
    %v231 = vld [vmem:[#allocation7 + $0x60] sm:$0xff]
    %v232 = vld [vmem:[#allocation7 + $0x68] sm:$0xff]
    %v233 = vld [vmem:[#allocation7 + $0x70] sm:$0xff]
    %v234 = vld [vmem:[#allocation7 + $0x78] sm:$0xff]
    %v235 = vld [vmem:[%s4] sm:$0x1]
    %v237 = vperm.slane %v235, 0
    %239 = vmatpush.msra.mxu0 %v234
    %240 = vmatpush.msra.mxu0 %v233
    %241 = vmatpush.msra.mxu0 %v232
    %242 = vmatpush.msra.mxu0 %v231
    %243 = vmatpush.msra.mxu0 %v230
    %244 = vmatpush.msra.mxu0 %v229
    %245 = vmatpush.msra.mxu0 %v228
    %246 = vmatpush.msra.mxu0 %v227
    %247 = vmatpush.msra.mxu0 %v226
    %248 = vmatpush.msra.mxu0 %v225
    %249 = vmatpush.msra.mxu0 %v224
    %250 = vmatpush.msra.mxu0 %v223
    %251 = vmatpush.msra.mxu0 %v222
    %252 = vmatpush.msra.mxu0 %v221
    %253 = vmatpush.msra.mxu0 %v220
    %254 = vmatpush.msra.mxu0 %v219
    %255 = vmatmul.f32.gmra.mxu0 %v218
    %v256 = vpop.f32.mrf.mxu0
    %v257 = vadd.f32 %v237, %v256
    %258 = vdwg.mxu0
    %v259 = vmax.f32 %v257, 0.0
    %v260 = vld [vmem:[#allocation8] sm:$0xff]
    %v261 = vld [vmem:[#allocation8 + $0x8] sm:$0xff]
    %v262 = vld [vmem:[#allocation8 + $0x10] sm:$0xff]
    %v263 = vld [vmem:[#allocation8 + $0x18] sm:$0xff]
    %v264 = vld [vmem:[#allocation8 + $0x20] sm:$0xff]
    %v265 = vld [vmem:[#allocation8 + $0x28] sm:$0xff]
    %v266 = vld [vmem:[#allocation8 + $0x30] sm:$0xff]
    %v267 = vld [vmem:[#allocation8 + $0x38] sm:$0xff]
    %v268 = vld [vmem:[#allocation8 + $0x40] sm:$0xff]
    %v269 = vld [vmem:[#allocation8 + $0x48] sm:$0xff]
    %v270 = vld [vmem:[#allocation8 + $0x50] sm:$0xff]
    %v271 = vld [vmem:[#allocation8 + $0x58] sm:$0xff]
    %v272 = vld [vmem:[#allocation8 + $0x60] sm:$0xff]
    %v273 = vld [vmem:[#allocation8 + $0x68] sm:$0xff]
    %v274 = vld [vmem:[#allocation8 + $0x70] sm:$0xff]
    %v275 = vld [vmem:[#allocation8 + $0x78] sm:$0xff]
    %v276 = vld [vmem:[%s6] sm:$0x1]
    %v278 = vperm.slane %v276, 0
    %280 = vmatpush.msra.mxu0 %v275
    %281 = vmatpush.msra.mxu0 %v274
    %282 = vmatpush.msra.mxu0 %v273
    %283 = vmatpush.msra.mxu0 %v272
    %284 = vmatpush.msra.mxu0 %v271
    %285 = vmatpush.msra.mxu0 %v270
    %286 = vmatpush.msra.mxu0 %v269
    %287 = vmatpush.msra.mxu0 %v268
    %288 = vmatpush.msra.mxu0 %v267
    %289 = vmatpush.msra.mxu0 %v266
    %290 = vmatpush.msra.mxu0 %v265
    %291 = vmatpush.msra.mxu0 %v264
    %292 = vmatpush.msra.mxu0 %v263
    %293 = vmatpush.msra.mxu0 %v262
    %294 = vmatpush.msra.mxu0 %v261
    %295 = vmatpush.msra.mxu0 %v260
    %296 = vmatmul.f32.gmra.mxu0 %v259
    %v297 = vpop.f32.mrf.mxu0
    %v298 = vadd.f32 %v278, %v297
    %299 = vdwg.mxu0
    %v300 = vld [vmem:[#allocation10] sm:$0xff]
    %v301 = vld [vmem:[#allocation10 + $0x8] sm:$0xff]
    %v302 = vld [vmem:[#allocation10 + $0x10] sm:$0xff]
    %v303 = vld [vmem:[#allocation10 + $0x18] sm:$0xff]
    %v304 = vld [vmem:[#allocation10 + $0x20] sm:$0xff]
    %v305 = vld [vmem:[#allocation10 + $0x28] sm:$0xff]
    %v306 = vld [vmem:[#allocation10 + $0x30] sm:$0xff]
    %v307 = vld [vmem:[#allocation10 + $0x38] sm:$0xff]
    %v308 = vld [vmem:[#allocation10 + $0x40] sm:$0xff]
    %v309 = vld [vmem:[#allocation10 + $0x48] sm:$0xff]
    %v310 = vld [vmem:[#allocation10 + $0x50] sm:$0xff]
    %v311 = vld [vmem:[#allocation10 + $0x58] sm:$0xff]
    %v312 = vld [vmem:[#allocation10 + $0x60] sm:$0xff]
    %v313 = vld [vmem:[#allocation10 + $0x68] sm:$0xff]
    %v314 = vld [vmem:[#allocation10 + $0x70] sm:$0xff]
    %v315 = vld [vmem:[#allocation10 + $0x78] sm:$0xff]
    %v316 = vld [vmem:[%s8] sm:$0x1]
    %v318 = vperm.slane %v316, 0
    %320 = vmatpush.msra.mxu0 %v315
    %321 = vmatpush.msra.mxu0 %v314
    %322 = vmatpush.msra.mxu0 %v313
    %323 = vmatpush.msra.mxu0 %v312
    %324 = vmatpush.msra.mxu0 %v311
    %325 = vmatpush.msra.mxu0 %v310
    %326 = vmatpush.msra.mxu0 %v309
    %327 = vmatpush.msra.mxu0 %v308
    %328 = vmatpush.msra.mxu0 %v307
    %329 = vmatpush.msra.mxu0 %v306
    %330 = vmatpush.msra.mxu0 %v305
    %331 = vmatpush.msra.mxu0 %v304
    %332 = vmatpush.msra.mxu0 %v303
    %333 = vmatpush.msra.mxu0 %v302
    %334 = vmatpush.msra.mxu0 %v301
    %335 = vmatpush.msra.mxu0 %v300
    %336 = vmatmul.f32.gmra.mxu0 %v298
    %v337 = vpop.f32.mrf.mxu0
    %v338 = vadd.f32 %v318, %v337
    %339 = vdwg.mxu0
    %v340 = vmax.f32 %v338, 0.0
    %v341 = vld [vmem:[#allocation11] sm:$0xff]
    %v342 = vld [vmem:[#allocation11 + $0x8] sm:$0xff]
    %v343 = vld [vmem:[#allocation11 + $0x10] sm:$0xff]
    %v344 = vld [vmem:[#allocation11 + $0x18] sm:$0xff]
    %v345 = vld [vmem:[#allocation11 + $0x20] sm:$0xff]
    %v346 = vld [vmem:[#allocation11 + $0x28] sm:$0xff]
    %v347 = vld [vmem:[#allocation11 + $0x30] sm:$0xff]
    %v348 = vld [vmem:[#allocation11 + $0x38] sm:$0xff]
    %v349 = vld [vmem:[#allocation11 + $0x40] sm:$0xff]
    %v350 = vld [vmem:[#allocation11 + $0x48] sm:$0xff]
    %v351 = vld [vmem:[#allocation11 + $0x50] sm:$0xff]
    %v352 = vld [vmem:[#allocation11 + $0x58] sm:$0xff]
    %v353 = vld [vmem:[#allocation11 + $0x60] sm:$0xff]
    %v354 = vld [vmem:[#allocation11 + $0x68] sm:$0xff]
    %v355 = vld [vmem:[#allocation11 + $0x70] sm:$0xff]
    %v356 = vld [vmem:[#allocation11 + $0x78] sm:$0xff]
    %v357 = vld [vmem:[%s10] sm:$0x1]
    %v359 = vperm.slane %v357, 0
    %361 = vmatpush.msra.mxu0 %v356
    %362 = vmatpush.msra.mxu0 %v355
    %363 = vmatpush.msra.mxu0 %v354
    %364 = vmatpush.msra.mxu0 %v353
    %365 = vmatpush.msra.mxu0 %v352
    %366 = vmatpush.msra.mxu0 %v351
    %367 = vmatpush.msra.mxu0 %v350
    %368 = vmatpush.msra.mxu0 %v349
    %369 = vmatpush.msra.mxu0 %v348
    %370 = vmatpush.msra.mxu0 %v347
    %371 = vmatpush.msra.mxu0 %v346
    %372 = vmatpush.msra.mxu0 %v345
    %373 = vmatpush.msra.mxu0 %v344
    %374 = vmatpush.msra.mxu0 %v343
    %375 = vmatpush.msra.mxu0 %v342
    %376 = vmatpush.msra.mxu0 %v341
    %377 = vmatmul.f32.gmra.mxu0 %v340
    %v378 = vpop.f32.mrf.mxu0
    %v379 = vadd.f32 %v359, %v378
    %380 = vdwg.mxu0
    %v381 = vmax.f32 %v379, 0.0
    %v382 = vld [vmem:[#allocation13] sm:$0xff]
    %v383 = vld [vmem:[#allocation13 + $0x8] sm:$0xff]
    %v384 = vld [vmem:[#allocation13 + $0x10] sm:$0xff]
    %v385 = vld [vmem:[#allocation13 + $0x18] sm:$0xff]
    %v386 = vld [vmem:[#allocation13 + $0x20] sm:$0xff]
    %v387 = vld [vmem:[#allocation13 + $0x28] sm:$0xff]
    %v388 = vld [vmem:[#allocation13 + $0x30] sm:$0xff]
    %v389 = vld [vmem:[#allocation13 + $0x38] sm:$0xff]
    %v390 = vld [vmem:[#allocation13 + $0x40] sm:$0xff]
    %v391 = vld [vmem:[#allocation13 + $0x48] sm:$0xff]
    %v392 = vld [vmem:[#allocation13 + $0x50] sm:$0xff]
    %v393 = vld [vmem:[#allocation13 + $0x58] sm:$0xff]
    %v394 = vld [vmem:[#allocation13 + $0x60] sm:$0xff]
    %v395 = vld [vmem:[#allocation13 + $0x68] sm:$0xff]
    %v396 = vld [vmem:[#allocation13 + $0x70] sm:$0xff]
    %v397 = vld [vmem:[#allocation13 + $0x78] sm:$0xff]
    %v398 = vld [vmem:[%s12] sm:$0x1]
    %v400 = vperm.slane %v398, 0
    %402 = vmatpush.msra.mxu0 %v397
    %403 = vmatpush.msra.mxu0 %v396
    %404 = vmatpush.msra.mxu0 %v395
    %405 = vmatpush.msra.mxu0 %v394
    %406 = vmatpush.msra.mxu0 %v393
    %407 = vmatpush.msra.mxu0 %v392
    %408 = vmatpush.msra.mxu0 %v391
    %409 = vmatpush.msra.mxu0 %v390
    %410 = vmatpush.msra.mxu0 %v389
    %411 = vmatpush.msra.mxu0 %v388
    %412 = vmatpush.msra.mxu0 %v387
    %413 = vmatpush.msra.mxu0 %v386
    %414 = vmatpush.msra.mxu0 %v385
    %415 = vmatpush.msra.mxu0 %v384
    %416 = vmatpush.msra.mxu0 %v383
    %417 = vmatpush.msra.mxu0 %v382
    %418 = vmatmul.f32.gmra.mxu0 %v381
    %v419 = vpop.f32.mrf.mxu0
    %v420 = vadd.f32 %v400, %v419
    %421 = vdwg.mxu0
    %v422 = vmul.f32 %v420, 0.5
    %v423 = vtanh.pop %v422
    %v424 = vmul.f32 %v423, 0.5
    %v425 = vadd.f32 %v424, 0.5
    %426 = vst [vmem:[#allocation16] sm:$0xff] %v425
    %v427 = vld [vmem:[#allocation14] sm:$0xff]
    %v428 = vld [vmem:[#allocation14 + $0x8] sm:$0xff]
    %v429 = vld [vmem:[#allocation14 + $0x10] sm:$0xff]
    %v430 = vld [vmem:[#allocation14 + $0x18] sm:$0xff]
    %v431 = vld [vmem:[#allocation14 + $0x20] sm:$0xff]
    %v432 = vld [vmem:[#allocation14 + $0x28] sm:$0xff]
    %v433 = vld [vmem:[#allocation14 + $0x30] sm:$0xff]
    %v434 = vld [vmem:[#allocation14 + $0x38] sm:$0xff]
    %v435 = vld [vmem:[#allocation14 + $0x40] sm:$0xff]
    %v436 = vld [vmem:[#allocation14 + $0x48] sm:$0xff]
    %v437 = vld [vmem:[#allocation14 + $0x50] sm:$0xff]
    %v438 = vld [vmem:[#allocation14 + $0x58] sm:$0xff]
    %v439 = vld [vmem:[#allocation14 + $0x60] sm:$0xff]
    %v440 = vld [vmem:[#allocation14 + $0x68] sm:$0xff]
    %v441 = vld [vmem:[#allocation14 + $0x70] sm:$0xff]
    %v442 = vld [vmem:[#allocation14 + $0x78] sm:$0xff]
    %v443 = vld [vmem:[%s14] sm:$0x1]
    %v445 = vperm.slane %v443, 0
    %447 = vmatpush.msra.mxu0 %v442
    %448 = vmatpush.msra.mxu0 %v441
    %449 = vmatpush.msra.mxu0 %v440
    %450 = vmatpush.msra.mxu0 %v439
    %451 = vmatpush.msra.mxu0 %v438
    %452 = vmatpush.msra.mxu0 %v437
    %453 = vmatpush.msra.mxu0 %v436
    %454 = vmatpush.msra.mxu0 %v435
    %455 = vmatpush.msra.mxu0 %v434
    %456 = vmatpush.msra.mxu0 %v433
    %457 = vmatpush.msra.mxu0 %v432
    %458 = vmatpush.msra.mxu0 %v431
    %459 = vmatpush.msra.mxu0 %v430
    %460 = vmatpush.msra.mxu0 %v429
    %461 = vmatpush.msra.mxu0 %v428
    %462 = vmatpush.msra.mxu0 %v427
    %463 = vmatmul.f32.gmra.mxu0 %v298
    %v464 = vpop.f32.mrf.mxu0
    %v465 = vadd.f32 %v445, %v464
    %466 = vdwg.mxu0
    %467 = vst [vmem:[#allocation17] sm:$0xff] %v465
    // Predicated region
    $region94: #{tpu_custom_call.1} parent=1 // pred_check
      _
    $region95: #{tpu_custom_call.1} parent=1 // pred_check_branch
      %469 = sbr.rel (0) target = $region97
    $region96: #{tpu_custom_call.1} parent=1 // pred_region
      %471 = vsyncadd [#allocation4], 0
      %s473 = sshll.u32 [#allocation16], 4
      %s474 = int_to_ptr.vmem [resolvable:$true] %s473
      %s475 = sshll.u32 %s15, 4
      %s476 = int_to_ptr.hbm [resolvable:$true] %s475
      %478 = dma.vmem_to_hbm [thread:$0]  %s474, 128, %s476, [#allocation4]
    $region97: #{tpu_custom_call.1} parent=1 // pred_fallthru
      _
    // Predicated region
    $region98: #{tpu_custom_call.1} parent=1 // pred_check
      _
    $region99: #{tpu_custom_call.1} parent=1 // pred_check_branch
      %480 = sbr.rel (0) target = $region101
    $region100: #{tpu_custom_call.1} parent=1 // pred_region
      %482 = vsyncadd [#allocation18], 0
      %s484 = sshll.u32 [#allocation17], 4
      %s485 = int_to_ptr.vmem [resolvable:$true] %s484
      %s486 = sshll.u32 %s16, 4
      %s487 = int_to_ptr.hbm [resolvable:$true] %s486
      %489 = dma.vmem_to_hbm [thread:$0]  %s485, 128, %s487, [#allocation18]
    $region101: #{tpu_custom_call.1} parent=1 // pred_fallthru
      _
    // Predicated region
    $region102: #{tpu_custom_call.1} parent=1 // pred_check
      _
    $region103: #{tpu_custom_call.1} parent=1 // pred_check_branch
      %491 = sbr.rel (0) target = $region105
    $region104: #{tpu_custom_call.1} parent=1 // pred_region
      %493 = dma.done [#allocation4], 128
    $region105: #{tpu_custom_call.1} parent=1 // pred_fallthru
      _
    // Predicated region
    $region106: #{tpu_custom_call.1} parent=1 // pred_check
      _
    $region107: #{tpu_custom_call.1} parent=1 // pred_check_branch
      %495 = sbr.rel (0) target = $region109
    $region108: #{tpu_custom_call.1} parent=1 // pred_region
      %497 = dma.done [#allocation18], 128
    $region109: #{tpu_custom_call.1} parent=1 // pred_fallthru
      _
    %498 = vsyncpa [#allocation3], 1
    %499 = vsyncpa [#allocation6], 1
    %500 = vsyncpa [#allocation9], 1
    %501 = vsyncpa [#allocation12], 1
    %502 = vsyncpa [#allocation15], 1
    %503 = vsyncpa [#allocation4], 1
    %504 = vsyncpa [#allocation18], 1

</llo_original>
